<compile_context>
chip_gen: v6e
topology: v6e:2x2x1
jax: 0.10.0
libtpu: 0.0.40
codegen_flags: <defaults>
</compile_context>

<pallas_src>
import functools

import jax
import jax.numpy as jnp
from jax.experimental import pallas as pl
from jax.experimental.pallas import tpu as pltpu

INPUT_SIZE = 784
HIDDEN_SIZE = 32
NUM_CLASSES = 10


def _round_up(n, m):
    return ((n + m - 1) // m) * m


def _mlp_kernel(x_ref, w1_ref, b1_ref, w2_ref, b2_ref, o_ref):
    # linear1: (TB, Kp)[bf16] @ (Kp, H)[bf16] -> f32 accum
    h = jnp.dot(x_ref[...], w1_ref[...], preferred_element_type=jnp.float32)
    # bias-add + ReLU in f32 (VPU-friendly on all generations)
    h = jnp.maximum(h + b1_ref[...], 0.0)
    # linear2: (TB, H)[bf16] @ (H, Np)[bf16] -> f32 accum
    out = jnp.dot(h.astype(w2_ref.dtype), w2_ref[...],
                  preferred_element_type=jnp.float32)
    o_ref[...] = (out + b2_ref[...]).astype(o_ref.dtype)


@functools.partial(jax.jit, static_argnames=("block_b",))
def neural_net_forward(x, w1, b1, w2, b2, *, block_b=512):
    """Forward pass of NeuralNet (Linear -> ReLU -> Linear).

    x : (B, input_size) float32
    w1: (input_size, hidden), b1: (hidden,) or (1, hidden)
    w2: (hidden, classes),    b2: (classes,) or (1, classes)
    returns (B, classes) float32
    """
    B, in_f = x.shape
    hidden = w1.shape[1]
    num_classes = w2.shape[1]

    # --- padding for clean (8, 128) layout / lane-dense output ---
    k_pad = _round_up(in_f, 128)            # 784 -> 896
    n_pad = _round_up(max(num_classes, 128), 128)   # 10 -> 128
    tb = min(block_b, _round_up(B, 8))      # batch tile (multiple of 8)
    b_pad = _round_up(B, tb)

    # --- stream bf16 operands (memory-bound kernel), zero-pad ---
    x_p = jnp.zeros((b_pad, k_pad), jnp.bfloat16)
    x_p = x_p.at[:B, :in_f].set(x.astype(jnp.bfloat16))
    w1_p = jnp.zeros((k_pad, hidden), jnp.bfloat16)
    w1_p = w1_p.at[:in_f, :].set(w1.astype(jnp.bfloat16))
    b1_p = b1.astype(jnp.float32).reshape(1, hidden)
    w2_p = jnp.zeros((hidden, n_pad), jnp.bfloat16)
    w2_p = w2_p.at[:, :num_classes].set(w2.astype(jnp.bfloat16))
    b2_p = jnp.zeros((1, n_pad), jnp.float32)
    b2_p = b2_p.at[:, :num_classes].set(b2.astype(jnp.float32).reshape(1, -1))

    grid = (b_pad // tb,)

    out = pl.pallas_call(
        _mlp_kernel,
        out_shape=jax.ShapeDtypeStruct((b_pad, n_pad), jnp.float32),
        grid_spec=pl.GridSpec(
            grid=grid,
            in_specs=[
                # x: streamed per batch tile (double-buffered by the pipeline)
                pl.BlockSpec((tb, k_pad), lambda i: (i, 0)),
                # weights / biases: constant index_map -> VMEM resident
                pl.BlockSpec((k_pad, hidden), lambda i: (0, 0)),
                pl.BlockSpec((1, hidden), lambda i: (0, 0)),
                pl.BlockSpec((hidden, n_pad), lambda i: (0, 0)),
                pl.BlockSpec((1, n_pad), lambda i: (0, 0)),
            ],
            out_specs=pl.BlockSpec((tb, n_pad), lambda i: (i, 0)),
        ),
        compiler_params=pltpu.CompilerParams(
            dimension_semantics=("parallel",)),
    )(x_p, w1_p, b1_p, w2_p, b2_p)

    return out[:B, :num_classes]


def init_params(key, input_size, hidden_size, num_classes):
    """Deterministic init mimicking PyTorch nn.Linear default:
    U(-1/sqrt(fan_in), 1/sqrt(fan_in)). Stored as (in, out) so kernel does x @ W."""
    k1, k2, k3, k4 = jax.random.split(key, 4)
    bound1 = 1.0 / jnp.sqrt(jnp.float32(input_size))
    bound2 = 1.0 / jnp.sqrt(jnp.float32(hidden_size))
    w1 = jax.random.uniform(k1, (input_size, hidden_size), jnp.float32,
                            -bound1, bound1)
    b1 = jax.random.uniform(k2, (1, hidden_size), jnp.float32, -bound1, bound1)
    w2 = jax.random.uniform(k3, (hidden_size, num_classes), jnp.float32,
                            -bound2, bound2)
    b2 = jax.random.uniform(k4, (1, num_classes), jnp.float32, -bound2, bound2)
    return w1, b1, w2, b2


def reference_forward(x, w1, b1, w2, b2):
    """Reference matching the kernel's bf16-storage / f32-accumulate numerics."""
    hi = jax.lax.Precision.HIGHEST
    xb = x.astype(jnp.bfloat16).astype(jnp.float32)
    w1b = w1.astype(jnp.bfloat16).astype(jnp.float32)
    w2b = w2.astype(jnp.bfloat16).astype(jnp.float32)
    h = jnp.maximum(jnp.dot(xb, w1b, precision=hi) + b1, 0.0)
    hb = h.astype(jnp.bfloat16).astype(jnp.float32)
    return jnp.dot(hb, w2b, precision=hi) + b2


if __name__ == "__main__":
    key = jax.random.PRNGKey(0)
    kx, kp = jax.random.split(key)

    B = 64
    x = jax.random.normal(kx, (B, INPUT_SIZE), jnp.float32)
    w1, b1, w2, b2 = init_params(kp, INPUT_SIZE, HIDDEN_SIZE, NUM_CLASSES)

    # block_b=32 -> grid=(2,) exercises the batch-tiled pipeline even at small B.
    out = neural_net_forward(x, w1, b1, w2, b2, block_b=32)
    out = jax.block_until_ready(out)

    ref = reference_forward(x, w1, b1, w2, b2)
    assert out.shape == (B, NUM_CLASSES), out.shape
    assert jnp.allclose(out, ref, atol=5e-3, rtol=5e-3), \
        float(jnp.max(jnp.abs(out - ref)))

    print("KERNEL_OK")
</pallas_src>

<mosaic_0001>
module attributes {stable_mosaic.version = 11 : i64} {
  func.func @_mlp_kernel(%arg0: i32, %arg1: memref<32x896xbf16, #tpu.memory_space<vmem>>, %arg2: memref<896x32xbf16, #tpu.memory_space<vmem>>, %arg3: memref<1x32xf32, #tpu.memory_space<vmem>>, %arg4: memref<32x128xbf16, #tpu.memory_space<vmem>>, %arg5: memref<1x128xf32, #tpu.memory_space<vmem>>, %arg6: memref<32x128xf32, #tpu.memory_space<vmem>>) attributes {dimension_semantics = [#tpu.dimension_semantics<parallel>], iteration_bounds = array<i64: 2>, scalar_prefetch = 0 : i64, scratch_operands = 0 : i64, tpu.core_type = #tpu.core_type<tc>, window_params = [{transform_indices = @transform_0, window_bounds = array<i64: 32, 896>}, {pipeline_mode = #tpu.pipeline_mode<synchronous>, transform_indices = @transform_1, window_bounds = array<i64: 896, 32>}, {pipeline_mode = #tpu.pipeline_mode<synchronous>, transform_indices = @transform_2, window_bounds = array<i64: 1, 32>}, {pipeline_mode = #tpu.pipeline_mode<synchronous>, transform_indices = @transform_3, window_bounds = array<i64: 32, 128>}, {pipeline_mode = #tpu.pipeline_mode<synchronous>, transform_indices = @transform_4, window_bounds = array<i64: 1, 128>}, {transform_indices = @transform_5, window_bounds = array<i64: 32, 128>}]} {
    %c0 = arith.constant 0 : index
    %c0_0 = arith.constant 0 : index
    %0 = vector.load %arg1[%c0, %c0_0] : memref<32x896xbf16, #tpu.memory_space<vmem>>, vector<32x896xbf16>
    %c0_1 = arith.constant 0 : index
    %c0_2 = arith.constant 0 : index
    %1 = vector.load %arg2[%c0_1, %c0_2] : memref<896x32xbf16, #tpu.memory_space<vmem>>, vector<896x32xbf16>
    %cst = arith.constant dense<0.000000e+00> : vector<32x32xf32>
    %2 = tpu.matmul %0, %1, %cst {dimension_numbers = #tpu.dot_dimension_numbers<[1], [0], [0], [1], [0, 0, 1, 1], [], []>} : vector<32x896xbf16>, vector<896x32xbf16>, vector<32x32xf32> -> vector<32x32xf32>
    %c0_3 = arith.constant 0 : index
    %c0_4 = arith.constant 0 : index
    %3 = vector.load %arg3[%c0_3, %c0_4] : memref<1x32xf32, #tpu.memory_space<vmem>>, vector<1x32xf32>
    %4 = vector.broadcast %3 : vector<1x32xf32> to vector<32x32xf32>
    %5 = arith.addf %2, %4 : vector<32x32xf32>
    %cst_5 = arith.constant 0.000000e+00 : f32
    %6 = vector.broadcast %cst_5 : f32 to vector<32x32xf32>
    %7 = arith.maximumf %5, %6 : vector<32x32xf32>
    %8 = arith.truncf %7 : vector<32x32xf32> to vector<32x32xbf16>
    %c0_6 = arith.constant 0 : index
    %c0_7 = arith.constant 0 : index
    %9 = vector.load %arg4[%c0_6, %c0_7] : memref<32x128xbf16, #tpu.memory_space<vmem>>, vector<32x128xbf16>
    %cst_8 = arith.constant dense<0.000000e+00> : vector<32x128xf32>
    %10 = tpu.matmul %8, %9, %cst_8 {dimension_numbers = #tpu.dot_dimension_numbers<[1], [0], [0], [1], [0, 0, 1, 1], [], []>} : vector<32x32xbf16>, vector<32x128xbf16>, vector<32x128xf32> -> vector<32x128xf32>
    %c0_9 = arith.constant 0 : index
    %c0_10 = arith.constant 0 : index
    %11 = vector.load %arg5[%c0_9, %c0_10] : memref<1x128xf32, #tpu.memory_space<vmem>>, vector<1x128xf32>
    %12 = vector.broadcast %11 : vector<1x128xf32> to vector<32x128xf32>
    %13 = arith.addf %10, %12 : vector<32x128xf32>
    %c0_11 = arith.constant 0 : index
    %c0_12 = arith.constant 0 : index
    %14 = vector.load %arg6[%c0_11, %c0_12] : memref<32x128xf32, #tpu.memory_space<vmem>>, vector<32x128xf32>
    tpu.vector_store %arg6[%c0_11, %c0_12], %13 {strides = array<i32>} : memref<32x128xf32, #tpu.memory_space<vmem>>, vector<32x128xf32>,
    return
  }
  func.func @transform_0(%arg0: i32) -> (i32, i32) {
    %c0_i32 = arith.constant 0 : i32
    %c0_i32_0 = arith.constant 0 : i32
    return %arg0, %c0_i32 : i32, i32
  }
  func.func @transform_1(%arg0: i32) -> (i32, i32) {
    %c0_i32 = arith.constant 0 : i32
    %c0_i32_0 = arith.constant 0 : i32
    %c0_i32_1 = arith.constant 0 : i32
    return %c0_i32, %c0_i32_0 : i32, i32
  }
  func.func @transform_2(%arg0: i32) -> (i32, i32) {
    %c0_i32 = arith.constant 0 : i32
    %c0_i32_0 = arith.constant 0 : i32
    %c0_i32_1 = arith.constant 0 : i32
    return %c0_i32, %c0_i32_0 : i32, i32
  }
  func.func @transform_3(%arg0: i32) -> (i32, i32) {
    %c0_i32 = arith.constant 0 : i32
    %c0_i32_0 = arith.constant 0 : i32
    %c0_i32_1 = arith.constant 0 : i32
    return %c0_i32, %c0_i32_0 : i32, i32
  }
  func.func @transform_4(%arg0: i32) -> (i32, i32) {
    %c0_i32 = arith.constant 0 : i32
    %c0_i32_0 = arith.constant 0 : i32
    %c0_i32_1 = arith.constant 0 : i32
    return %c0_i32, %c0_i32_0 : i32, i32
  }
  func.func @transform_5(%arg0: i32) -> (i32, i32) {
    %c0_i32 = arith.constant 0 : i32
    %c0_i32_0 = arith.constant 0 : i32
    return %arg0, %c0_i32 : i32, i32
  }
}

</mosaic_0001>

<llo_original>
// kernel: neural_net_forward.1
$region0: #{neural_net_forward.1}
  #allocation0 [shape = 'u32[]', space=smem, size = 0x4, offset = 0x4, fixed_abs, tag = 'smem constant byte address 0x4 - core index']
  #allocation1 [shape = 'u32[144,128]{1,0:T(1,128)}', space=vmem, size = 0x12000, scoped, tag = 'internal scratch']
  %s0 = inlined_call_operand.vmem [shape: bf16[64,896], index: 0, kind: input, shape index: {}]
  %s1 = inlined_call_operand.vmem [shape: bf16[896,32], index: 1, kind: input, shape index: {}]
  %s2 = inlined_call_operand.vmem [shape: f32[1,32], index: 2, kind: input, shape index: {}]
  %s3 = inlined_call_operand.vmem [shape: bf16[32,128], index: 3, kind: input, shape index: {}]
  %s4 = inlined_call_operand.vmem [shape: f32[1,128], index: 4, kind: input, shape index: {}]
  %s5 = inlined_call_operand.vmem [shape: f32[64,128], index: 5, kind: output, shape index: {}]
  %s6 = sld [smem:[#allocation0]]
  $region53: #{neural_net_forward.1} parent=0
    _
  %s8 = ssub.s32 1, %s6
  %s9 = scalar_select 0, %s8, %s6
  loop: start=0, step=1, limit=4
  $region2: #{neural_net_forward.1} parent=0 // loop_pre_header
    _
  $region3: #{neural_net_forward.1} parent=0 // loop_header
    %s11 = sphi 0, %s15
    %p12 = scmp.ge.s32.totalorder %s11, 4
    %s21 = sphi 0, %s23
    %s24 = sphi 0, %s21
    %s25 = sphi 0, %s24
    %s41 = sphi 0, %s25
    %s45 = sphi 0, %s45
    %s47 = sphi 0, %s45
    %s48 = sphi 0, %s47
    %s62 = sphi 0, %s48
    %s66 = sphi 0, %s66
    %s68 = sphi 0, %s66
    %s69 = sphi 0, %s68
    %s83 = sphi 0, %s69
    %s87 = sphi 0, %s87
    %s89 = sphi 0, %s87
    %s90 = sphi 0, %s89
    %s104 = sphi 0, %s90
    %s108 = sphi 0, %s108
    %s110 = sphi 0, %s108
    %s111 = sphi 0, %s110
    %s125 = sphi 0, %s111
    %s131 = sphi 0, %s133
    %s134 = sphi 0, %s131
    %s135 = sphi 0, %s134
    %s151 = sphi 0, %s135
  $region4: #{neural_net_forward.1} parent=0 // loop_header_branch
    %14 = sbr.rel (%p12) target = $region8
  $region5: #{neural_net_forward.1} parent=0 // loop_body
    %s16 = ssub.s32 %s11, 1
    %s17 = ssub.s32 %s11, 2
    %s18 = sadd.s32 %s11, 1
    %s19 = ssub.s32 %s11, %s18
    %p20 = scmp.eq.s32.totalorder %s19, 0
    %s22 = sadd.s32 %s21, 1
    %s23 = scalar_select %p20, %s21, %s22
    %p26 = pneg %p20
    %p27 = scmp.eq.s32.totalorder %s11, 1
    %p28 = por %p26, %p27
    %p29 = scmp.ne.s32.totalorder %s21, %s24
    %p30 = scmp.eq.s32.totalorder %s11, 0
    %p31 = por %p29, %p30
    %p32 = scmp.ne.s32.totalorder %s21, %s24
    %p33 = scmp.eq.s32.totalorder %s16, 1
    %p34 = por %p32, %p33
    %p35 = scmp.ne.s32.totalorder %s24, %s25
    %p36 = scmp.eq.s32.totalorder %s16, 0
    %p37 = por %p35, %p36
    %p38 = scmp.ne.s32.totalorder %s24, %s25
    %p39 = scmp.eq.s32.totalorder %s17, 1
    %p40 = por %p38, %p39
    %p42 = scmp.ne.s32.totalorder %s25, %s41
    %p43 = scmp.eq.s32.totalorder %s17, 0
    %p44 = por %p42, %p43
    %s46 = sadd.s32 %s45, 1
    %p49 = scmp.eq.s32.totalorder %s11, 1
    %p50 = scmp.ne.s32.totalorder %s45, %s47
    %p51 = scmp.eq.s32.totalorder %s11, 0
    %p52 = por %p50, %p51
    %p53 = scmp.ne.s32.totalorder %s45, %s47
    %p54 = scmp.eq.s32.totalorder %s16, 1
    %p55 = por %p53, %p54
    %p56 = scmp.ne.s32.totalorder %s47, %s48
    %p57 = scmp.eq.s32.totalorder %s16, 0
    %p58 = por %p56, %p57
    %p59 = scmp.ne.s32.totalorder %s47, %s48
    %p60 = scmp.eq.s32.totalorder %s17, 1
    %p61 = por %p59, %p60
    %p63 = scmp.ne.s32.totalorder %s48, %s62
    %p64 = scmp.eq.s32.totalorder %s17, 0
    %p65 = por %p63, %p64
    %s67 = sadd.s32 %s66, 1
    %p70 = scmp.eq.s32.totalorder %s11, 1
    %p71 = scmp.ne.s32.totalorder %s66, %s68
    %p72 = scmp.eq.s32.totalorder %s11, 0
    %p73 = por %p71, %p72
    %p74 = scmp.ne.s32.totalorder %s66, %s68
    %p75 = scmp.eq.s32.totalorder %s16, 1
    %p76 = por %p74, %p75
    %p77 = scmp.ne.s32.totalorder %s68, %s69
    %p78 = scmp.eq.s32.totalorder %s16, 0
    %p79 = por %p77, %p78
    %p80 = scmp.ne.s32.totalorder %s68, %s69
    %p81 = scmp.eq.s32.totalorder %s17, 1
    %p82 = por %p80, %p81
    %p84 = scmp.ne.s32.totalorder %s69, %s83
    %p85 = scmp.eq.s32.totalorder %s17, 0
    %p86 = por %p84, %p85
    %s88 = sadd.s32 %s87, 1
    %p91 = scmp.eq.s32.totalorder %s11, 1
    %p92 = scmp.ne.s32.totalorder %s87, %s89
    %p93 = scmp.eq.s32.totalorder %s11, 0
    %p94 = por %p92, %p93
    %p95 = scmp.ne.s32.totalorder %s87, %s89
    %p96 = scmp.eq.s32.totalorder %s16, 1
    %p97 = por %p95, %p96
    %p98 = scmp.ne.s32.totalorder %s89, %s90
    %p99 = scmp.eq.s32.totalorder %s16, 0
    %p100 = por %p98, %p99
    %p101 = scmp.ne.s32.totalorder %s89, %s90
    %p102 = scmp.eq.s32.totalorder %s17, 1
    %p103 = por %p101, %p102
    %p105 = scmp.ne.s32.totalorder %s90, %s104
    %p106 = scmp.eq.s32.totalorder %s17, 0
    %p107 = por %p105, %p106
    %s109 = sadd.s32 %s108, 1
    %p112 = scmp.eq.s32.totalorder %s11, 1
    %p113 = scmp.ne.s32.totalorder %s108, %s110
    %p114 = scmp.eq.s32.totalorder %s11, 0
    %p115 = por %p113, %p114
    %p116 = scmp.ne.s32.totalorder %s108, %s110
    %p117 = scmp.eq.s32.totalorder %s16, 1
    %p118 = por %p116, %p117
    %p119 = scmp.ne.s32.totalorder %s110, %s111
    %p120 = scmp.eq.s32.totalorder %s16, 0
    %p121 = por %p119, %p120
    %p122 = scmp.ne.s32.totalorder %s110, %s111
    %p123 = scmp.eq.s32.totalorder %s17, 1
    %p124 = por %p122, %p123
    %p126 = scmp.ne.s32.totalorder %s111, %s125
    %p127 = scmp.eq.s32.totalorder %s17, 0
    %p128 = por %p126, %p127
    %s129 = ssub.s32 %s11, %s18
    %p130 = scmp.eq.s32.totalorder %s129, 0
    %s132 = sadd.s32 %s131, 1
    %s133 = scalar_select %p130, %s131, %s132
    %p136 = pneg %p130
    %p137 = scmp.eq.s32.totalorder %s11, 1
    %p138 = por %p136, %p137
    %p139 = scmp.ne.s32.totalorder %s131, %s134
    %p140 = scmp.eq.s32.totalorder %s11, 0
    %p141 = por %p139, %p140
    %p142 = scmp.ne.s32.totalorder %s131, %s134
    %p143 = scmp.eq.s32.totalorder %s16, 1
    %p144 = por %p142, %p143
    %p145 = scmp.ne.s32.totalorder %s134, %s135
    %p146 = scmp.eq.s32.totalorder %s16, 0
    %p147 = por %p145, %p146
    %p148 = scmp.ne.s32.totalorder %s134, %s135
    %p149 = scmp.eq.s32.totalorder %s17, 1
    %p150 = por %p148, %p149
    %p152 = scmp.ne.s32.totalorder %s135, %s151
    %p153 = scmp.eq.s32.totalorder %s17, 0
    %p154 = por %p152, %p153
    %p155 = scmp.le.s32.totalorder 1, %s11
    %p156 = scmp.lt.s32.totalorder %s11, 3
    %p157 = pnand %p155, %p156
    %p158 = pneg %p157
    // Predicated region
    $region9: #{neural_net_forward.1} parent=5 // pred_check
      _
    $region10: #{neural_net_forward.1} parent=5 // pred_check_branch
      %160 = sbr.rel (%p157) target = $region12
    $region11: #{neural_net_forward.1} parent=5 // pred_region
      %s161 = ssub.s32 %s11, 1
      // Predicated region
      $region13: #{neural_net_forward.1} parent=11 // pred_check
        %p162 = pneg %p58
      $region14: #{neural_net_forward.1} parent=11 // pred_check_branch
        %164 = sbr.rel (%p162) target = $region16
      $region15: #{neural_net_forward.1} parent=11 // pred_region
        _
      $region16: #{neural_net_forward.1} parent=11 // pred_fallthru
        _
      // Predicated region
      $region17: #{neural_net_forward.1} parent=11 // pred_check
        %p165 = pneg %p79
      $region18: #{neural_net_forward.1} parent=11 // pred_check_branch
        %167 = sbr.rel (%p165) target = $region20
      $region19: #{neural_net_forward.1} parent=11 // pred_region
        _
      $region20: #{neural_net_forward.1} parent=11 // pred_fallthru
        _
      // Predicated region
      $region21: #{neural_net_forward.1} parent=11 // pred_check
        %p168 = pneg %p100
      $region22: #{neural_net_forward.1} parent=11 // pred_check_branch
        %170 = sbr.rel (%p168) target = $region24
      $region23: #{neural_net_forward.1} parent=11 // pred_region
        _
      $region24: #{neural_net_forward.1} parent=11 // pred_fallthru
        _
      // Predicated region
      $region25: #{neural_net_forward.1} parent=11 // pred_check
        %p171 = pneg %p121
      $region26: #{neural_net_forward.1} parent=11 // pred_check_branch
        %173 = sbr.rel (%p171) target = $region28
      $region27: #{neural_net_forward.1} parent=11 // pred_region
        _
      $region28: #{neural_net_forward.1} parent=11 // pred_fallthru
        _
    $region12: #{neural_net_forward.1} parent=5 // pred_fallthru
      _
    %p174 = scmp.lt.s32.totalorder %s11, 2
    // Predicated region
    $region29: #{neural_net_forward.1} parent=5 // pred_check
      %p175 = pneg %p174
    $region30: #{neural_net_forward.1} parent=5 // pred_check_branch
      %177 = sbr.rel (%p175) target = $region32
    $region31: #{neural_net_forward.1} parent=5 // pred_region
      // Predicated region
      $region33: #{neural_net_forward.1} parent=31 // pred_check
        %p178 = pneg %p31
      $region34: #{neural_net_forward.1} parent=31 // pred_check_branch
        %180 = sbr.rel (%p178) target = $region36
      $region35: #{neural_net_forward.1} parent=31 // pred_region
        %s181 = smul.u32 4, %s11
        %p182 = scmp.lt.s32.totalorder %s181, 7
        %s183 = scalar_select %p182, %s181, 7
        %s184 = smul.addr %s183, 7
        %s185 = smul.addr %s184, 4
        %s186 = scalar_lea.vmem %s0, %s185
        %s187 = smul.u32 4, %s11
      $region36: #{neural_net_forward.1} parent=31 // pred_fallthru
        _
    $region32: #{neural_net_forward.1} parent=5 // pred_fallthru
      _
    %p188 = scmp.le.s32.totalorder 1, %s11
    %p189 = scmp.lt.s32.totalorder %s11, 3
    %p190 = pnand %p188, %p189
    %p191 = pneg %p190
    // Predicated region
    $region37: #{neural_net_forward.1} parent=5 // pred_check
      _
    $region38: #{neural_net_forward.1} parent=5 // pred_check_branch
      %193 = sbr.rel (%p190) target = $region40
    $region39: #{neural_net_forward.1} parent=5 // pred_region
      %s194 = ssub.s32 %s11, 1
      %s195 = smul.u32 4, %s16
      %p196 = scmp.lt.s32.totalorder %s195, 7
      %s197 = scalar_select %p196, %s195, 7
      %s198 = smul.addr %s197, 7
      %s199 = smul.addr %s198, 4
      %s200 = scalar_lea.vmem %s0, %s199
      %p201 = pneg %p37
      %p202 = pneg %p34
      %p203 = pneg %p58
      %p204 = pneg %p55
      %p205 = pneg %p79
      %p206 = pneg %p76
      %p207 = pneg %p100
      %p208 = pneg %p97
      %p209 = pneg %p121
      %p210 = pneg %p118
      %p211 = pneg %p147
      %p212 = pneg %p144
      %s213 = smul.u32 4, %s16
      %p214 = scmp.lt.s32.totalorder %s213, 7
      %s215 = scalar_select %p214, %s213, 7
      %s216 = smul.addr %s215, 8
      %s217 = scalar_lea.vmem %s5, %s216
      %s218 = smul.u32 4, %s16
      %p219 = scmp.lt.s32.totalorder %s218, 7
      %s220 = scalar_select %p219, %s218, 7
      %s221 = smul.addr %s220, 7
      %s222 = smul.addr %s221, 4
      %s223 = scalar_lea.vmem %s0, %s222
      %s224 = smul.u32 4, %s16
      %s225 = smul.u32 4, %s16
      %p226 = scmp.lt.s32.totalorder %s225, 7
      %s227 = scalar_select %p226, %s225, 7
      %s228 = smul.addr %s227, 8
      %s229 = scalar_lea.vmem %s5, %s228
      %s230 = smul.u32 4, %s16
      %v232 = vld [vmem:[%s223] sm:$0xff]
      %v233 = vld [vmem:[%s223 + $0x8] sm:$0xff]
      %v234 = vld [vmem:[%s223 + $0x10] sm:$0xff]
      %v235 = vld [vmem:[%s223 + $0x18] sm:$0xf]
      %v236 = vld [vmem:[%s223 + $0x1c] sm:$0xff]
      %v237 = vld [vmem:[%s223 + $0x24] sm:$0xff]
      %v238 = vld [vmem:[%s223 + $0x2c] sm:$0xff]
      %v239 = vld [vmem:[%s223 + $0x34] sm:$0xf]
      %v240 = vld [vmem:[%s223 + $0x38] sm:$0xff]
      %v241 = vld [vmem:[%s223 + $0x40] sm:$0xff]
      %v242 = vld [vmem:[%s223 + $0x48] sm:$0xff]
      %v243 = vld [vmem:[%s223 + $0x50] sm:$0xf]
      %v244 = vld [vmem:[%s223 + $0x54] sm:$0xff]
      %v245 = vld [vmem:[%s223 + $0x5c] sm:$0xff]
      %v246 = vld [vmem:[%s223 + $0x64] sm:$0xff]
      %v247 = vld [vmem:[%s223 + $0x6c] sm:$0xf]
      %v248 = vld [vmem:[%s1] sm:$0xf]
      %v249 = vld [vmem:[%s1 + $0x4] sm:$0xf]
      %v250 = vld [vmem:[%s1 + $0x8] sm:$0xf]
      %v251 = vld [vmem:[%s1 + $0xc] sm:$0xf]
      %v252 = vld [vmem:[%s1 + $0x10] sm:$0xf]
      %v253 = vld [vmem:[%s1 + $0x14] sm:$0xf]
      %v254 = vld [vmem:[%s1 + $0x18] sm:$0xf]
      %v255 = vld [vmem:[%s1 + $0x1c] sm:$0xf]
      %v256 = vld [vmem:[%s1 + $0x20] sm:$0xf]
      %v257 = vld [vmem:[%s1 + $0x24] sm:$0xf]
      %v258 = vld [vmem:[%s1 + $0x28] sm:$0xf]
      %v259 = vld [vmem:[%s1 + $0x2c] sm:$0xf]
      %v260 = vld [vmem:[%s1 + $0x30] sm:$0xf]
      %v261 = vld [vmem:[%s1 + $0x34] sm:$0xf]
      %v262 = vld [vmem:[%s1 + $0x38] sm:$0xf]
      %v263 = vld [vmem:[%s1 + $0x3c] sm:$0xf]
      %v264 = vld [vmem:[%s1 + $0x40] sm:$0xf]
      %v265 = vld [vmem:[%s1 + $0x44] sm:$0xf]
      %v266 = vld [vmem:[%s1 + $0x48] sm:$0xf]
      %v267 = vld [vmem:[%s1 + $0x4c] sm:$0xf]
      %v268 = vld [vmem:[%s1 + $0x50] sm:$0xf]
      %v269 = vld [vmem:[%s1 + $0x54] sm:$0xf]
      %v270 = vld [vmem:[%s1 + $0x58] sm:$0xf]
      %v271 = vld [vmem:[%s1 + $0x5c] sm:$0xf]
      %v272 = vld [vmem:[%s1 + $0x60] sm:$0xf]
      %v273 = vld [vmem:[%s1 + $0x64] sm:$0xf]
      %v274 = vld [vmem:[%s1 + $0x68] sm:$0xf]
      %v275 = vld [vmem:[%s1 + $0x6c] sm:$0xf]
      %v276 = vld [vmem:[%s1 + $0x70] sm:$0xf]
      %v277 = vld [vmem:[%s1 + $0x74] sm:$0xf]
      %v278 = vld [vmem:[%s1 + $0x78] sm:$0xf]
      %v279 = vld [vmem:[%s1 + $0x7c] sm:$0xf]
      %v280 = vld [vmem:[%s1 + $0x80] sm:$0xf]
      %v281 = vld [vmem:[%s1 + $0x84] sm:$0xf]
      %v282 = vld [vmem:[%s1 + $0x88] sm:$0xf]
      %v283 = vld [vmem:[%s1 + $0x8c] sm:$0xf]
      %v284 = vld [vmem:[%s1 + $0x90] sm:$0xf]
      %v285 = vld [vmem:[%s1 + $0x94] sm:$0xf]
      %v286 = vld [vmem:[%s1 + $0x98] sm:$0xf]
      %v287 = vld [vmem:[%s1 + $0x9c] sm:$0xf]
      %v288 = vld [vmem:[%s1 + $0xa0] sm:$0xf]
      %v289 = vld [vmem:[%s1 + $0xa4] sm:$0xf]
      %v290 = vld [vmem:[%s1 + $0xa8] sm:$0xf]
      %v291 = vld [vmem:[%s1 + $0xac] sm:$0xf]
      %v292 = vld [vmem:[%s1 + $0xb0] sm:$0xf]
      %v293 = vld [vmem:[%s1 + $0xb4] sm:$0xf]
      %v294 = vld [vmem:[%s1 + $0xb8] sm:$0xf]
      %v295 = vld [vmem:[%s1 + $0xbc] sm:$0xf]
      %v296 = vld [vmem:[%s1 + $0xc0] sm:$0xf]
      %v297 = vld [vmem:[%s1 + $0xc4] sm:$0xf]
      %v298 = vld [vmem:[%s1 + $0xc8] sm:$0xf]
      %v299 = vld [vmem:[%s1 + $0xcc] sm:$0xf]
      %v300 = vld [vmem:[%s1 + $0xd0] sm:$0xf]
      %v301 = vld [vmem:[%s1 + $0xd4] sm:$0xf]
      %v302 = vld [vmem:[%s1 + $0xd8] sm:$0xf]
      %v303 = vld [vmem:[%s1 + $0xdc] sm:$0xf]
      %v304 = vld [vmem:[%s1 + $0xe0] sm:$0xf]
      %v305 = vld [vmem:[%s1 + $0xe4] sm:$0xf]
      %v306 = vld [vmem:[%s1 + $0xe8] sm:$0xf]
      %v307 = vld [vmem:[%s1 + $0xec] sm:$0xf]
      %v308 = vld [vmem:[%s1 + $0xf0] sm:$0xf]
      %v309 = vld [vmem:[%s1 + $0xf4] sm:$0xf]
      %v310 = vld [vmem:[%s1 + $0xf8] sm:$0xf]
      %v311 = vld [vmem:[%s1 + $0xfc] sm:$0xf]
      %v312 = vld [vmem:[%s1 + $0x100] sm:$0xf]
      %v313 = vld [vmem:[%s1 + $0x104] sm:$0xf]
      %v314 = vld [vmem:[%s1 + $0x108] sm:$0xf]
      %v315 = vld [vmem:[%s1 + $0x10c] sm:$0xf]
      %v316 = vld [vmem:[%s1 + $0x110] sm:$0xf]
      %v317 = vld [vmem:[%s1 + $0x114] sm:$0xf]
      %v318 = vld [vmem:[%s1 + $0x118] sm:$0xf]
      %v319 = vld [vmem:[%s1 + $0x11c] sm:$0xf]
      %v320 = vld [vmem:[%s1 + $0x120] sm:$0xf]
      %v321 = vld [vmem:[%s1 + $0x124] sm:$0xf]
      %v322 = vld [vmem:[%s1 + $0x128] sm:$0xf]
      %v323 = vld [vmem:[%s1 + $0x12c] sm:$0xf]
      %v324 = vld [vmem:[%s1 + $0x130] sm:$0xf]
      %v325 = vld [vmem:[%s1 + $0x134] sm:$0xf]
      %v326 = vld [vmem:[%s1 + $0x138] sm:$0xf]
      %v327 = vld [vmem:[%s1 + $0x13c] sm:$0xf]
      %v328 = vld [vmem:[%s1 + $0x140] sm:$0xf]
      %v329 = vld [vmem:[%s1 + $0x144] sm:$0xf]
      %v330 = vld [vmem:[%s1 + $0x148] sm:$0xf]
      %v331 = vld [vmem:[%s1 + $0x14c] sm:$0xf]
      %v332 = vld [vmem:[%s1 + $0x150] sm:$0xf]
      %v333 = vld [vmem:[%s1 + $0x154] sm:$0xf]
      %v334 = vld [vmem:[%s1 + $0x158] sm:$0xf]
      %v335 = vld [vmem:[%s1 + $0x15c] sm:$0xf]
      %v336 = vld [vmem:[%s1 + $0x160] sm:$0xf]
      %v337 = vld [vmem:[%s1 + $0x164] sm:$0xf]
      %v338 = vld [vmem:[%s1 + $0x168] sm:$0xf]
      %v339 = vld [vmem:[%s1 + $0x16c] sm:$0xf]
      %v340 = vld [vmem:[%s1 + $0x170] sm:$0xf]
      %v341 = vld [vmem:[%s1 + $0x174] sm:$0xf]
      %v342 = vld [vmem:[%s1 + $0x178] sm:$0xf]
      %v343 = vld [vmem:[%s1 + $0x17c] sm:$0xf]
      %v344 = vld [vmem:[%s1 + $0x180] sm:$0xf]
      %v345 = vld [vmem:[%s1 + $0x184] sm:$0xf]
      %v346 = vld [vmem:[%s1 + $0x188] sm:$0xf]
      %v347 = vld [vmem:[%s1 + $0x18c] sm:$0xf]
      %v348 = vld [vmem:[%s1 + $0x190] sm:$0xf]
      %v349 = vld [vmem:[%s1 + $0x194] sm:$0xf]
      %v350 = vld [vmem:[%s1 + $0x198] sm:$0xf]
      %v351 = vld [vmem:[%s1 + $0x19c] sm:$0xf]
      %v352 = vld [vmem:[%s1 + $0x1a0] sm:$0xf]
      %v353 = vld [vmem:[%s1 + $0x1a4] sm:$0xf]
      %v354 = vld [vmem:[%s1 + $0x1a8] sm:$0xf]
      %v355 = vld [vmem:[%s1 + $0x1ac] sm:$0xf]
      %v356 = vld [vmem:[%s1 + $0x1b0] sm:$0xf]
      %v357 = vld [vmem:[%s1 + $0x1b4] sm:$0xf]
      %v358 = vld [vmem:[%s1 + $0x1b8] sm:$0xf]
      %v359 = vld [vmem:[%s1 + $0x1bc] sm:$0xf]
      %v360 = vld [vmem:[%s2] sm:$0x1]
      %v362 = vlaneseq
      %v363 = vshrl.u32 %v362, 7
      %v364 = vsub.s32 0, %v363
      %v365 = vrot.slane %v360, %v364
      %v383 = vunpack.c.l.b16 %v232
      %v384 = vunpack.c.h.b16 %v232
      %v385 = vunpack.c.l.b16 %v233
      %v386 = vunpack.c.h.b16 %v233
      %v387 = vunpack.c.l.b16 %v234
      %v388 = vunpack.c.h.b16 %v234
      %v389 = vunpack.c.l.b16 %v235
      %v390 = vunpack.c.l.b16 %v236
      %v391 = vunpack.c.h.b16 %v236
      %v392 = vunpack.c.l.b16 %v237
      %v393 = vunpack.c.h.b16 %v237
      %v394 = vunpack.c.l.b16 %v238
      %v395 = vunpack.c.h.b16 %v238
      %v396 = vunpack.c.l.b16 %v239
      %v397 = vunpack.c.l.b16 %v240
      %v398 = vunpack.c.h.b16 %v240
      %v399 = vunpack.c.l.b16 %v241
      %v400 = vunpack.c.h.b16 %v241
      %v401 = vunpack.c.l.b16 %v242
      %v402 = vunpack.c.h.b16 %v242
      %v403 = vunpack.c.l.b16 %v243
      %v404 = vunpack.c.l.b16 %v244
      %v405 = vunpack.c.h.b16 %v244
      %v406 = vunpack.c.l.b16 %v245
      %v407 = vunpack.c.h.b16 %v245
      %v408 = vunpack.c.l.b16 %v246
      %v409 = vunpack.c.h.b16 %v246
      %v410 = vunpack.c.l.b16 %v247
      %v411 = vpack.c.b16 %v390, %v383
      %v412 = vpack.c.b16 %v391, %v384
      %v413 = vpack.c.b16 %v392, %v385
      %v414 = vpack.c.b16 %v393, %v386
      %v415 = vpack.c.b16 %v394, %v387
      %v416 = vpack.c.b16 %v395, %v388
      %v417 = vpack.c.b16 %v396, %v389
      %v418 = vpack.c.b16 %v404, %v397
      %v419 = vpack.c.b16 %v405, %v398
      %v420 = vpack.c.b16 %v406, %v399
      %v421 = vpack.c.b16 %v407, %v400
      %v422 = vpack.c.b16 %v408, %v401
      %v423 = vpack.c.b16 %v409, %v402
      %v424 = vpack.c.b16 %v410, %v403
      %v551 = vunpack.c.l.b16 %v248
      %v552 = vunpack.c.l.b16 %v249
      %v553 = vunpack.c.l.b16 %v250
      %v554 = vunpack.c.l.b16 %v251
      %v555 = vunpack.c.l.b16 %v252
      %v556 = vunpack.c.l.b16 %v253
      %v557 = vunpack.c.l.b16 %v254
      %v558 = vunpack.c.l.b16 %v255
      %v559 = vunpack.c.l.b16 %v256
      %v560 = vunpack.c.l.b16 %v257
      %v561 = vunpack.c.l.b16 %v258
      %v562 = vunpack.c.l.b16 %v259
      %v563 = vunpack.c.l.b16 %v260
      %v564 = vunpack.c.l.b16 %v261
      %v565 = vunpack.c.l.b16 %v262
      %v566 = vunpack.c.l.b16 %v263
      %v567 = vunpack.c.l.b16 %v264
      %v568 = vunpack.c.l.b16 %v265
      %v569 = vunpack.c.l.b16 %v266
      %v570 = vunpack.c.l.b16 %v267
      %v571 = vunpack.c.l.b16 %v268
      %v572 = vunpack.c.l.b16 %v269
      %v573 = vunpack.c.l.b16 %v270
      %v574 = vunpack.c.l.b16 %v271
      %v575 = vunpack.c.l.b16 %v272
      %v576 = vunpack.c.l.b16 %v273
      %v577 = vunpack.c.l.b16 %v274
      %v578 = vunpack.c.l.b16 %v275
      %v579 = vunpack.c.l.b16 %v276
      %v580 = vunpack.c.l.b16 %v277
      %v581 = vunpack.c.l.b16 %v278
      %v582 = vunpack.c.l.b16 %v279
      %v583 = vunpack.c.l.b16 %v280
      %v584 = vunpack.c.l.b16 %v281
      %v585 = vunpack.c.l.b16 %v282
      %v586 = vunpack.c.l.b16 %v283
      %v587 = vunpack.c.l.b16 %v284
      %v588 = vunpack.c.l.b16 %v285
      %v589 = vunpack.c.l.b16 %v286
      %v590 = vunpack.c.l.b16 %v287
      %v591 = vunpack.c.l.b16 %v288
      %v592 = vunpack.c.l.b16 %v289
      %v593 = vunpack.c.l.b16 %v290
      %v594 = vunpack.c.l.b16 %v291
      %v595 = vunpack.c.l.b16 %v292
      %v596 = vunpack.c.l.b16 %v293
      %v597 = vunpack.c.l.b16 %v294
      %v598 = vunpack.c.l.b16 %v295
      %v599 = vunpack.c.l.b16 %v296
      %v600 = vunpack.c.l.b16 %v297
      %v601 = vunpack.c.l.b16 %v298
      %v602 = vunpack.c.l.b16 %v299
      %v603 = vunpack.c.l.b16 %v300
      %v604 = vunpack.c.l.b16 %v301
      %v605 = vunpack.c.l.b16 %v302
      %v606 = vunpack.c.l.b16 %v303
      %v607 = vunpack.c.l.b16 %v304
      %v608 = vunpack.c.l.b16 %v305
      %v609 = vunpack.c.l.b16 %v306
      %v610 = vunpack.c.l.b16 %v307
      %v611 = vunpack.c.l.b16 %v308
      %v612 = vunpack.c.l.b16 %v309
      %v613 = vunpack.c.l.b16 %v310
      %v614 = vunpack.c.l.b16 %v311
      %v615 = vunpack.c.l.b16 %v312
      %v616 = vunpack.c.l.b16 %v313
      %v617 = vunpack.c.l.b16 %v314
      %v618 = vunpack.c.l.b16 %v315
      %v619 = vunpack.c.l.b16 %v316
      %v620 = vunpack.c.l.b16 %v317
      %v621 = vunpack.c.l.b16 %v318
      %v622 = vunpack.c.l.b16 %v319
      %v623 = vunpack.c.l.b16 %v320
      %v624 = vunpack.c.l.b16 %v321
      %v625 = vunpack.c.l.b16 %v322
      %v626 = vunpack.c.l.b16 %v323
      %v627 = vunpack.c.l.b16 %v324
      %v628 = vunpack.c.l.b16 %v325
      %v629 = vunpack.c.l.b16 %v326
      %v630 = vunpack.c.l.b16 %v327
      %v631 = vunpack.c.l.b16 %v328
      %v632 = vunpack.c.l.b16 %v329
      %v633 = vunpack.c.l.b16 %v330
      %v634 = vunpack.c.l.b16 %v331
      %v635 = vunpack.c.l.b16 %v332
      %v636 = vunpack.c.l.b16 %v333
      %v637 = vunpack.c.l.b16 %v334
      %v638 = vunpack.c.l.b16 %v335
      %v639 = vunpack.c.l.b16 %v336
      %v640 = vunpack.c.l.b16 %v337
      %v641 = vunpack.c.l.b16 %v338
      %v642 = vunpack.c.l.b16 %v339
      %v643 = vunpack.c.l.b16 %v340
      %v644 = vunpack.c.l.b16 %v341
      %v645 = vunpack.c.l.b16 %v342
      %v646 = vunpack.c.l.b16 %v343
      %v647 = vunpack.c.l.b16 %v344
      %v648 = vunpack.c.l.b16 %v345
      %v649 = vunpack.c.l.b16 %v346
      %v650 = vunpack.c.l.b16 %v347
      %v651 = vunpack.c.l.b16 %v348
      %v652 = vunpack.c.l.b16 %v349
      %v653 = vunpack.c.l.b16 %v350
      %v654 = vunpack.c.l.b16 %v351
      %v655 = vunpack.c.l.b16 %v352
      %v656 = vunpack.c.l.b16 %v353
      %v657 = vunpack.c.l.b16 %v354
      %v658 = vunpack.c.l.b16 %v355
      %v659 = vunpack.c.l.b16 %v356
      %v660 = vunpack.c.l.b16 %v357
      %v661 = vunpack.c.l.b16 %v358
      %v662 = vunpack.c.l.b16 %v359
      %v663 = vpack.c.b16 %v552, %v551
      %v664 = vpack.c.b16 %v554, %v553
      %v665 = vpack.c.b16 %v556, %v555
      %v666 = vpack.c.b16 %v558, %v557
      %v667 = vpack.c.b16 %v560, %v559
      %v668 = vpack.c.b16 %v562, %v561
      %v669 = vpack.c.b16 %v564, %v563
      %v670 = vpack.c.b16 %v566, %v565
      %v671 = vpack.c.b16 %v568, %v567
      %v672 = vpack.c.b16 %v570, %v569
      %v673 = vpack.c.b16 %v572, %v571
      %v674 = vpack.c.b16 %v574, %v573
      %v675 = vpack.c.b16 %v576, %v575
      %v676 = vpack.c.b16 %v578, %v577
      %v677 = vpack.c.b16 %v580, %v579
      %v678 = vpack.c.b16 %v582, %v581
      %v679 = vpack.c.b16 %v584, %v583
      %v680 = vpack.c.b16 %v586, %v585
      %v681 = vpack.c.b16 %v588, %v587
      %v682 = vpack.c.b16 %v590, %v589
      %v683 = vpack.c.b16 %v592, %v591
      %v684 = vpack.c.b16 %v594, %v593
      %v685 = vpack.c.b16 %v596, %v595
      %v686 = vpack.c.b16 %v598, %v597
      %v687 = vpack.c.b16 %v600, %v599
      %v688 = vpack.c.b16 %v602, %v601
      %v689 = vpack.c.b16 %v604, %v603
      %v690 = vpack.c.b16 %v606, %v605
      %v691 = vpack.c.b16 %v608, %v607
      %v692 = vpack.c.b16 %v610, %v609
      %v693 = vpack.c.b16 %v612, %v611
      %v694 = vpack.c.b16 %v614, %v613
      %v695 = vpack.c.b16 %v616, %v615
      %v696 = vpack.c.b16 %v618, %v617
      %v697 = vpack.c.b16 %v620, %v619
      %v698 = vpack.c.b16 %v622, %v621
      %v699 = vpack.c.b16 %v624, %v623
      %v700 = vpack.c.b16 %v626, %v625
      %v701 = vpack.c.b16 %v628, %v627
      %v702 = vpack.c.b16 %v630, %v629
      %v703 = vpack.c.b16 %v632, %v631
      %v704 = vpack.c.b16 %v634, %v633
      %v705 = vpack.c.b16 %v636, %v635
      %v706 = vpack.c.b16 %v638, %v637
      %v707 = vpack.c.b16 %v640, %v639
      %v708 = vpack.c.b16 %v642, %v641
      %v709 = vpack.c.b16 %v644, %v643
      %v710 = vpack.c.b16 %v646, %v645
      %v711 = vpack.c.b16 %v648, %v647
      %v712 = vpack.c.b16 %v650, %v649
      %v713 = vpack.c.b16 %v652, %v651
      %v714 = vpack.c.b16 %v654, %v653
      %v715 = vpack.c.b16 %v656, %v655
      %v716 = vpack.c.b16 %v658, %v657
      %v717 = vpack.c.b16 %v660, %v659
      %v718 = vpack.c.b16 %v662, %v661
      %775 = vmatprep.subr.bf16.mxu0 0
      %776 = vmatpush1.bf16.msra.mxu0 %v670
      %777 = vmatprep.subr.bf16.mxu0 0
      %778 = vmatpush1.bf16.msra.mxu0 %v669
      %779 = vmatprep.subr.bf16.mxu0 0
      %780 = vmatpush1.bf16.msra.mxu0 %v668
      %781 = vmatprep.subr.bf16.mxu0 0
      %782 = vmatpush1.bf16.msra.mxu0 %v667
      %783 = vmatprep.subr.bf16.mxu0 0
      %784 = vmatpush1.bf16.msra.mxu0 %v666
      %785 = vmatprep.subr.bf16.mxu0 0
      %786 = vmatpush1.bf16.msra.mxu0 %v665
      %787 = vmatprep.subr.bf16.mxu0 0
      %788 = vmatpush1.bf16.msra.mxu0 %v664
      %789 = vmatprep.subr.bf16.mxu0 0
      %790 = vmatpush1.bf16.msra.mxu0 %v663
      %791 = vmatprep.subr.bf16.mxu0 0
      %792 = vmatpush2.bf16.msra.mxu0 %v678
      %793 = vmatprep.subr.bf16.mxu0 0
      %794 = vmatpush2.bf16.msra.mxu0 %v677
      %795 = vmatprep.subr.bf16.mxu0 0
      %796 = vmatpush2.bf16.msra.mxu0 %v676
      %797 = vmatprep.subr.bf16.mxu0 0
      %798 = vmatpush2.bf16.msra.mxu0 %v675
      %799 = vmatprep.subr.bf16.mxu0 0
      %800 = vmatpush2.bf16.msra.mxu0 %v674
      %801 = vmatprep.subr.bf16.mxu0 0
      %802 = vmatpush2.bf16.msra.mxu0 %v673
      %803 = vmatprep.subr.bf16.mxu0 0
      %804 = vmatpush2.bf16.msra.mxu0 %v672
      %805 = vmatprep.subr.bf16.mxu0 0
      %806 = vmatpush2.bf16.msra.mxu0 %v671
      %807 = vmatprep.mubr.bf16.mxu0 %v412
      %808 = vmatmul.mubr.bf16.gmra.mxu0 %v411
      %v809 = vpop.f32.mrf.mxu0
      %v810 = vadd.f32 %v365, %v809
      %v811 = vpop.f32.mrf.mxu0
      %v812 = vpop.f32.mrf.mxu0
      %v813 = vadd.f32 %v365, %v812
      %v814 = vpop.f32.mrf.mxu0
      %815 = vmatprep.mubr.bf16.mxu0 %v419
      %816 = vmatmul.mubr.bf16.gmra.mxu0 %v418
      %v817 = vpop.f32.mrf.mxu0
      %v818 = vadd.f32 %v365, %v817
      %v819 = vpop.f32.mrf.mxu0
      %v820 = vpop.f32.mrf.mxu0
      %v821 = vadd.f32 %v365, %v820
      %v822 = vpop.f32.mrf.mxu0
      %823 = vdwg.mxu0
      %824 = vmatprep.subr.bf16.mxu0 0
      %825 = vmatpush1.bf16.msra.mxu0 %v686
      %826 = vmatprep.subr.bf16.mxu0 0
      %827 = vmatpush1.bf16.msra.mxu0 %v685
      %828 = vmatprep.subr.bf16.mxu0 0
      %829 = vmatpush1.bf16.msra.mxu0 %v684
      %830 = vmatprep.subr.bf16.mxu0 0
      %831 = vmatpush1.bf16.msra.mxu0 %v683
      %832 = vmatprep.subr.bf16.mxu0 0
      %833 = vmatpush1.bf16.msra.mxu0 %v682
      %834 = vmatprep.subr.bf16.mxu0 0
      %835 = vmatpush1.bf16.msra.mxu0 %v681
      %836 = vmatprep.subr.bf16.mxu0 0
      %837 = vmatpush1.bf16.msra.mxu0 %v680
      %838 = vmatprep.subr.bf16.mxu0 0
      %839 = vmatpush1.bf16.msra.mxu0 %v679
      %840 = vmatprep.subr.bf16.mxu0 0
      %841 = vmatpush2.bf16.msra.mxu0 %v694
      %842 = vmatprep.subr.bf16.mxu0 0
      %843 = vmatpush2.bf16.msra.mxu0 %v693
      %844 = vmatprep.subr.bf16.mxu0 0
      %845 = vmatpush2.bf16.msra.mxu0 %v692
      %846 = vmatprep.subr.bf16.mxu0 0
      %847 = vmatpush2.bf16.msra.mxu0 %v691
      %848 = vmatprep.subr.bf16.mxu0 0
      %849 = vmatpush2.bf16.msra.mxu0 %v690
      %850 = vmatprep.subr.bf16.mxu0 0
      %851 = vmatpush2.bf16.msra.mxu0 %v689
      %852 = vmatprep.subr.bf16.mxu0 0
      %853 = vmatpush2.bf16.msra.mxu0 %v688
      %854 = vmatprep.subr.bf16.mxu0 0
      %855 = vmatpush2.bf16.msra.mxu0 %v687
      %856 = vmatprep.mubr.bf16.mxu0 %v414
      %857 = vmatmul.mubr.bf16.gmra.mxu0 %v413
      %v858 = vpop.f32.mrf.mxu0
      %v859 = vadd.f32 %v810, %v858
      %v860 = vpop.f32.mrf.mxu0
      %v861 = vpop.f32.mrf.mxu0
      %v862 = vadd.f32 %v813, %v861
      %v863 = vpop.f32.mrf.mxu0
      %864 = vmatprep.mubr.bf16.mxu0 %v421
      %865 = vmatmul.mubr.bf16.gmra.mxu0 %v420
      %v866 = vpop.f32.mrf.mxu0
      %v867 = vadd.f32 %v818, %v866
      %v868 = vpop.f32.mrf.mxu0
      %v869 = vpop.f32.mrf.mxu0
      %v870 = vadd.f32 %v821, %v869
      %v871 = vpop.f32.mrf.mxu0
      %872 = vdwg.mxu0
      %873 = vmatprep.subr.bf16.mxu0 0
      %874 = vmatpush1.bf16.msra.mxu0 %v702
      %875 = vmatprep.subr.bf16.mxu0 0
      %876 = vmatpush1.bf16.msra.mxu0 %v701
      %877 = vmatprep.subr.bf16.mxu0 0
      %878 = vmatpush1.bf16.msra.mxu0 %v700
      %879 = vmatprep.subr.bf16.mxu0 0
      %880 = vmatpush1.bf16.msra.mxu0 %v699
      %881 = vmatprep.subr.bf16.mxu0 0
      %882 = vmatpush1.bf16.msra.mxu0 %v698
      %883 = vmatprep.subr.bf16.mxu0 0
      %884 = vmatpush1.bf16.msra.mxu0 %v697
      %885 = vmatprep.subr.bf16.mxu0 0
      %886 = vmatpush1.bf16.msra.mxu0 %v696
      %887 = vmatprep.subr.bf16.mxu0 0
      %888 = vmatpush1.bf16.msra.mxu0 %v695
      %889 = vmatprep.subr.bf16.mxu0 0
      %890 = vmatpush2.bf16.msra.mxu0 %v710
      %891 = vmatprep.subr.bf16.mxu0 0
      %892 = vmatpush2.bf16.msra.mxu0 %v709
      %893 = vmatprep.subr.bf16.mxu0 0
      %894 = vmatpush2.bf16.msra.mxu0 %v708
      %895 = vmatprep.subr.bf16.mxu0 0
      %896 = vmatpush2.bf16.msra.mxu0 %v707
      %897 = vmatprep.subr.bf16.mxu0 0
      %898 = vmatpush2.bf16.msra.mxu0 %v706
      %899 = vmatprep.subr.bf16.mxu0 0
      %900 = vmatpush2.bf16.msra.mxu0 %v705
      %901 = vmatprep.subr.bf16.mxu0 0
      %902 = vmatpush2.bf16.msra.mxu0 %v704
      %903 = vmatprep.subr.bf16.mxu0 0
      %904 = vmatpush2.bf16.msra.mxu0 %v703
      %905 = vmatprep.mubr.bf16.mxu0 %v416
      %906 = vmatmul.mubr.bf16.gmra.mxu0 %v415
      %v907 = vpop.f32.mrf.mxu0
      %v908 = vadd.f32 %v859, %v907
      %v909 = vpop.f32.mrf.mxu0
      %v910 = vpop.f32.mrf.mxu0
      %v911 = vadd.f32 %v862, %v910
      %v912 = vpop.f32.mrf.mxu0
      %913 = vmatprep.mubr.bf16.mxu0 %v423
      %914 = vmatmul.mubr.bf16.gmra.mxu0 %v422
      %v915 = vpop.f32.mrf.mxu0
      %v916 = vadd.f32 %v867, %v915
      %v917 = vpop.f32.mrf.mxu0
      %v918 = vpop.f32.mrf.mxu0
      %v919 = vadd.f32 %v870, %v918
      %v920 = vpop.f32.mrf.mxu0
      %921 = vdwg.mxu0
      %922 = vmatprep.subr.bf16.mxu0 0
      %923 = vmatpush1.bf16.msra.mxu0 %v718
      %924 = vmatprep.subr.bf16.mxu0 0
      %925 = vmatpush1.bf16.msra.mxu0 %v717
      %926 = vmatprep.subr.bf16.mxu0 0
      %927 = vmatpush1.bf16.msra.mxu0 %v716
      %928 = vmatprep.subr.bf16.mxu0 0
      %929 = vmatpush1.bf16.msra.mxu0 %v715
      %930 = vmatprep.subr.bf16.mxu0 0
      %931 = vmatpush1.bf16.msra.mxu0 %v714
      %932 = vmatprep.subr.bf16.mxu0 0
      %933 = vmatpush1.bf16.msra.mxu0 %v713
      %934 = vmatprep.subr.bf16.mxu0 0
      %935 = vmatpush1.bf16.msra.mxu0 %v712
      %936 = vmatprep.subr.bf16.mxu0 0
      %937 = vmatpush1.bf16.msra.mxu0 %v711
      %938 = vmatprep.subr.bf16.mxu0 0
      %939 = vmatpush2.bf16.msra.mxu0 0
      %940 = vmatprep.subr.bf16.mxu0 0
      %941 = vmatpush2.bf16.msra.mxu0 0
      %942 = vmatprep.subr.bf16.mxu0 0
      %943 = vmatpush2.bf16.msra.mxu0 0
      %944 = vmatprep.subr.bf16.mxu0 0
      %945 = vmatpush2.bf16.msra.mxu0 0
      %946 = vmatprep.subr.bf16.mxu0 0
      %947 = vmatpush2.bf16.msra.mxu0 0
      %948 = vmatprep.subr.bf16.mxu0 0
      %949 = vmatpush2.bf16.msra.mxu0 0
      %950 = vmatprep.subr.bf16.mxu0 0
      %951 = vmatpush2.bf16.msra.mxu0 0
      %952 = vmatprep.subr.bf16.mxu0 0
      %953 = vmatpush2.bf16.msra.mxu0 0
      %954 = vmatprep.mubr.bf16.mxu0 0
      %955 = vmatmul.mubr.bf16.gmra.mxu0 %v417
      %v956 = vpop.f32.mrf.mxu0
      %v957 = vadd.f32 %v908, %v956
      %v958 = vpop.f32.mrf.mxu0
      %v959 = vpop.f32.mrf.mxu0
      %v960 = vadd.f32 %v911, %v959
      %v961 = vpop.f32.mrf.mxu0
      %962 = vmatprep.mubr.bf16.mxu0 0
      %963 = vmatmul.mubr.bf16.gmra.mxu0 %v424
      %v964 = vpop.f32.mrf.mxu0
      %v965 = vadd.f32 %v916, %v964
      %v966 = vpop.f32.mrf.mxu0
      %v967 = vpop.f32.mrf.mxu0
      %v968 = vadd.f32 %v919, %v967
      %v969 = vpop.f32.mrf.mxu0
      %970 = vdwg.mxu0
      %v971 = vmax.f32 %v957, 0.0
      %v972 = vmax.f32 %v960, 0.0
      %v973 = vmax.f32 %v965, 0.0
      %v974 = vmax.f32 %v968, 0.0
      %v975 = vpack.c.bf16 %v972, %v971
      %v976 = vpack.c.bf16 %v974, %v973
      %v977 = vld [vmem:[%s3] sm:$0xf]
      %v978 = vld [vmem:[%s3 + $0x4] sm:$0xf]
      %v979 = vld [vmem:[%s3 + $0x8] sm:$0xf]
      %v980 = vld [vmem:[%s3 + $0xc] sm:$0xf]
      %v981 = vld [vmem:[%s4] sm:$0x1]
      %v983 = vlaneseq
      %v984 = vshrl.u32 %v983, 7
      %v985 = vsub.s32 0, %v984
      %v986 = vrot.slane %v981, %v985
      %v992 = vunpack.c.l.b16 %v977
      %v993 = vunpack.c.l.b16 %v978
      %v994 = vunpack.c.l.b16 %v979
      %v995 = vunpack.c.l.b16 %v980
      %v996 = vpack.c.b16 %v993, %v992
      %v997 = vpack.c.b16 %v995, %v994
      %vm1000 = vcmask 261120
      %v1002 = vsel %vm1000, %v975, 0
      %v1005 = vsel %vm1000, %v976, 0
      %1007 = vmatprep.subr.bf16.mxu0 0
      %1008 = vmatpush1.bf16.msra.mxu0 0
      %1009 = vmatprep.subr.bf16.mxu0 0
      %1010 = vmatpush1.bf16.msra.mxu0 0
      %1011 = vmatprep.subr.bf16.mxu0 0
      %1012 = vmatpush1.bf16.msra.mxu0 0
      %1013 = vmatprep.subr.bf16.mxu0 0
      %1014 = vmatpush1.bf16.msra.mxu0 0
      %1015 = vmatprep.subr.bf16.mxu0 0
      %1016 = vmatpush1.bf16.msra.mxu0 0
      %1017 = vmatprep.subr.bf16.mxu0 0
      %1018 = vmatpush1.bf16.msra.mxu0 0
      %1019 = vmatprep.subr.bf16.mxu0 0
      %1020 = vmatpush1.bf16.msra.mxu0 %v997
      %1021 = vmatprep.subr.bf16.mxu0 0
      %1022 = vmatpush1.bf16.msra.mxu0 %v996
      %1023 = vmatprep.subr.bf16.mxu0 0
      %1024 = vmatpush2.bf16.msra.mxu0 0
      %1025 = vmatprep.subr.bf16.mxu0 0
      %1026 = vmatpush2.bf16.msra.mxu0 0
      %1027 = vmatprep.subr.bf16.mxu0 0
      %1028 = vmatpush2.bf16.msra.mxu0 0
      %1029 = vmatprep.subr.bf16.mxu0 0
      %1030 = vmatpush2.bf16.msra.mxu0 0
      %1031 = vmatprep.subr.bf16.mxu0 0
      %1032 = vmatpush2.bf16.msra.mxu0 0
      %1033 = vmatprep.subr.bf16.mxu0 0
      %1034 = vmatpush2.bf16.msra.mxu0 0
      %1035 = vmatprep.subr.bf16.mxu0 0
      %1036 = vmatpush2.bf16.msra.mxu0 0
      %1037 = vmatprep.subr.bf16.mxu0 0
      %1038 = vmatpush2.bf16.msra.mxu0 0
      %1039 = vmatprep.mubr.bf16.mxu0 0
      %1040 = vmatmul.mubr.bf16.gmra.mxu0 %v1002
      %v1041 = vpop.f32.mrf.mxu0
      %v1042 = vadd.f32 %v986, %v1041
      %v1043 = vpop.f32.mrf.mxu0
      %v1044 = vpop.f32.mrf.mxu0
      %v1045 = vadd.f32 %v986, %v1044
      %v1046 = vpop.f32.mrf.mxu0
      %1047 = vmatprep.mubr.bf16.mxu0 0
      %1048 = vmatmul.mubr.bf16.gmra.mxu0 %v1005
      %v1049 = vpop.f32.mrf.mxu0
      %v1050 = vadd.f32 %v986, %v1049
      %v1051 = vpop.f32.mrf.mxu0
      %v1052 = vpop.f32.mrf.mxu0
      %v1053 = vadd.f32 %v986, %v1052
      %v1054 = vpop.f32.mrf.mxu0
      %1055 = vdwg.mxu0
      %1056 = vst [vmem:[%s229] sm:$0xff] %v1042
      %1057 = vst [vmem:[%s229 + $0x8] sm:$0xff] %v1045
      %1058 = vst [vmem:[%s229 + $0x10] sm:$0xff] %v1050
      %1059 = vst [vmem:[%s229 + $0x18] sm:$0xff] %v1053
      %s1060 = smul.u32 4, %s16
      %p1061 = scmp.lt.s32.totalorder %s1060, 7
      %s1062 = scalar_select %p1061, %s1060, 7
      %s1063 = smul.addr %s1062, 8
      %s1064 = scalar_lea.vmem %s5, %s1063
      // Predicated region
      $region41: #{neural_net_forward.1} parent=39 // pred_check
        %p1065 = pneg %p144
      $region42: #{neural_net_forward.1} parent=39 // pred_check_branch
        %1067 = sbr.rel (%p1065) target = $region44
      $region43: #{neural_net_forward.1} parent=39 // pred_region
        %s1068 = smul.u32 4, %s16
      $region44: #{neural_net_forward.1} parent=39 // pred_fallthru
        _
    $region40: #{neural_net_forward.1} parent=5 // pred_fallthru
      _
    %p1069 = scmp.le.s32.totalorder 2, %s11
    // Predicated region
    $region45: #{neural_net_forward.1} parent=5 // pred_check
      %p1070 = pneg %p1069
    $region46: #{neural_net_forward.1} parent=5 // pred_check_branch
      %1072 = sbr.rel (%p1070) target = $region48
    $region47: #{neural_net_forward.1} parent=5 // pred_region
      %s1073 = ssub.s32 %s11, 2
      // Predicated region
      $region49: #{neural_net_forward.1} parent=47 // pred_check
        %p1074 = pneg %p150
      $region50: #{neural_net_forward.1} parent=47 // pred_check_branch
        %1076 = sbr.rel (%p1074) target = $region52
      $region51: #{neural_net_forward.1} parent=47 // pred_region
        %s1077 = smul.u32 4, %s17
        %p1078 = scmp.lt.s32.totalorder %s1077, 7
        %s1079 = scalar_select %p1078, %s1077, 7
        %s1080 = smul.addr %s1079, 8
        %s1081 = scalar_lea.vmem %s5, %s1080
      $region52: #{neural_net_forward.1} parent=47 // pred_fallthru
        _
    $region48: #{neural_net_forward.1} parent=5 // pred_fallthru
      _
  $region6: #{neural_net_forward.1} parent=0 // loop_footer
    %s15 = sadd.s32 1, %s11
  $region7: #{neural_net_forward.1} parent=0 // loop_footer_branch
    %10 = sbr.rel target = $region3
  $region8: #{neural_net_forward.1} parent=0 // loop_exit
    _

</llo_original>
